<compile_context>
chip_gen: v5e
topology: v5e:2x2
jax: 0.10.0
libtpu: 0.0.40
codegen_flags: <defaults>
</compile_context>

<pallas_src>
import functools
import math

import jax
import jax.numpy as jnp
from jax.experimental import pallas as pl
from jax.experimental.pallas import tpu as pltpu

EPS_F32 = 1e-5  # torch LayerNorm-equivalent eps for float32 inputs


# ----------------------------- helpers ---------------------------------------

def _layernorm(x, g, eps=EPS_F32):
    # torch.var(..., unbiased=False) == mean of squared deviations.
    mean = jnp.mean(x, axis=-1, keepdims=True)
    var = jnp.mean(jnp.square(x - mean), axis=-1, keepdims=True)
    return (x - mean) * jax.lax.rsqrt(var + eps) * g


def _choose_batch_block(batch, seq, target_rows=512):
    """Largest divisor of `batch` with bb*seq <= target_rows, keeping >=2
    parallel batch blocks when possible (v7x has 2 TensorCores)."""
    bb = max(1, min(batch, max(1, target_rows // max(seq, 1))))
    while batch % bb:
        bb -= 1
    if batch > 1 and batch // bb < 2:
        bb2 = batch // 2
        while bb2 >= 1 and batch % bb2:
            bb2 -= 1
        bb = max(1, bb2)
    return bb


def _choose_ff_block(ff_inner, override=None):
    if override is not None:
        assert ff_inner % override == 0
        return override
    if ff_inner <= 512:
        return ff_inner
    t = 512
    while t >= 128:
        if ff_inner % t == 0:
            return t
        t -= 128
    return ff_inner


def _vmem_limit(nbytes_est):
    # Explicit scoped-VMEM budget with headroom; capped at v7x physical VMEM.
    return int(min(max(2 * nbytes_est, 16 << 20), 64 << 20))


# ------------------------------- kernels --------------------------------------

def layernorm_kernel(x_ref, g_ref, o_ref):
    # Fallback (only used when depth == 0).
    o_ref[...] = _layernorm(x_ref[...], g_ref[...]).astype(o_ref.dtype)


def attn_block_kernel(x_ref, g_in_ref, g_pre_ref, w_qkv_ref, w_out_ref,
                      g_out_ref, o_ref, *, seq_len, heads, dim_head,
                      fuse_norm_in, compute_dtype, approx_recip):
    """One PreNorm + Attention + residual block on a (Bb*N, D) row slab.

    Single grid step per batch block: one fused QKV matmul, per-head attention
    einsums (contraction depth is dim_head by construction), and one full-depth
    output projection over the concatenated context.
    """
    rows, dim = x_ref.shape
    bb = rows // seq_len
    inner = heads * dim_head

    xb = x_ref[...]
    if fuse_norm_in:                                 # fused Transformer.norm_in
        xb = _layernorm(xb, g_in_ref[...])
    normed = _layernorm(xb, g_pre_ref[...]).astype(compute_dtype)

    # One wide, lane-dense QKV projection (q-scale pre-folded into the weight).
    qkv = jnp.dot(normed, w_qkv_ref[...], preferred_element_type=jnp.float32)
    qkv = qkv.reshape(bb, seq_len, 3 * inner)        # leading-dim split only

    ctx_parts = []
    for h in range(heads):                           # static unroll over heads
        lo = h * dim_head
        q = qkv[:, :, lo:lo + dim_head].astype(compute_dtype)
        k = qkv[:, :, inner + lo:inner + lo + dim_head].astype(compute_dtype)
        v = qkv[:, :, 2 * inner + lo:2 * inner + lo + dim_head].astype(compute_dtype)
        sim = jnp.einsum('bid,bjd->bij', q, k,
                         preferred_element_type=jnp.float32)
        sim = sim - jnp.max(sim, axis=-1, keepdims=True)
        p = jnp.exp(sim)
        p = p * pl.reciprocal(jnp.sum(p, axis=-1, keepdims=True),
                              approx=approx_recip)
        ctx = jnp.einsum('bij,bjd->bid', p.astype(compute_dtype), v,
                         preferred_element_type=jnp.float32)
        ctx_parts.append(ctx.astype(compute_dtype))

    ctx = jnp.concatenate(ctx_parts, axis=-1).reshape(rows, inner)
    out = jnp.dot(ctx, w_out_ref[...], preferred_element_type=jnp.float32)
    out = _layernorm(out, g_out_ref[...]) + xb       # to_out LayerNorm + residual
    o_ref[...] = out.astype(o_ref.dtype)


def ff_block_kernel(x_ref, g_pre_ref, w1x_ref, w1g_ref, g_mid_ref, w2_ref,
                    gmid_w2_ref, g_post_ref, o_ref,
                    normed_ref, acc_ref, ssum_ref, ssq_ref,
                    *, ff_inner, fuse_norm_out, compute_dtype):
    """PreNorm + FeedForward(GEGLU) + residual, tiled over ff_inner.

    Grid = (batch_blocks, ff_tiles).  The inner LayerNorm over ff_inner is
    decomposed with per-row running sum / sum-of-squares so each tile only
    needs its own weight blocks:
      LN(h) @ w2 = rsqrt(var) * [ (h*g_mid) @ w2 - mean * (g_mid @ w2) ]
    with (g_mid @ w2) precomputed on the host.
    """
    k = pl.program_id(1)

    @pl.when(k == 0)
    def _init():
        normed_ref[...] = _layernorm(x_ref[...],
                                     g_pre_ref[...]).astype(normed_ref.dtype)
        acc_ref[...] = jnp.zeros_like(acc_ref)
        ssum_ref[...] = jnp.zeros_like(ssum_ref)
        ssq_ref[...] = jnp.zeros_like(ssq_ref)

    normed = normed_ref[...]
    xp = jnp.dot(normed, w1x_ref[...], preferred_element_type=jnp.float32)
    gate = jnp.dot(normed, w1g_ref[...], preferred_element_type=jnp.float32)
    hid = xp * jax.nn.gelu(gate, approximate=False)          # GEGLU, f32
    ssum_ref[...] += jnp.sum(hid, axis=-1, keepdims=True)
    ssq_ref[...] += jnp.sum(hid * hid, axis=-1, keepdims=True)
    acc_ref[...] += jnp.dot((hid * g_mid_ref[...]).astype(compute_dtype),
                            w2_ref[...], preferred_element_type=jnp.float32)

    @pl.when(k == pl.num_programs(1) - 1)
    def _fin():
        inv_n = 1.0 / ff_inner
        mean = ssum_ref[...] * inv_n
        var = ssq_ref[...] * inv_n - mean * mean
        rstd = jax.lax.rsqrt(var + EPS_F32)
        out = (acc_ref[...] - mean * gmid_w2_ref[...]) * rstd + x_ref[...]
        if fuse_norm_out:                          # fused Transformer.norm_out
            out = _layernorm(out, g_post_ref[...])
        o_ref[...] = out.astype(o_ref.dtype)


# ------------------------------- wrappers --------------------------------------

def pallas_layernorm(x2d, seq_len, g, *, target_rows=512):
    rows_total, dim = x2d.shape
    batch = rows_total // seq_len
    bb = _choose_batch_block(batch, seq_len, target_rows)
    rows = bb * seq_len
    return pl.pallas_call(
        layernorm_kernel,
        out_shape=jax.ShapeDtypeStruct((rows_total, dim), x2d.dtype),
        grid=(batch // bb,),
        in_specs=[pl.BlockSpec((rows, dim), lambda b: (b, 0)),
                  pl.BlockSpec((1, dim), lambda b: (0, 0))],
        out_specs=pl.BlockSpec((rows, dim), lambda b: (b, 0)),
        compiler_params=pltpu.CompilerParams(
            dimension_semantics=("parallel",)),
    )(x2d, g.reshape(1, dim))


def pallas_attn_block(x2d, seq_len, p, heads, dim_head, *, g_in=None,
                      approx_recip=False, target_rows=512):
    rows_total, dim = x2d.shape
    inner = heads * dim_head
    compute_dtype = p['w_qkv'].dtype
    batch = rows_total // seq_len
    bb = _choose_batch_block(batch, seq_len, target_rows)
    rows = bb * seq_len
    nb = batch // bb
    fuse_norm_in = g_in is not None
    if g_in is None:
        g_in = jnp.ones((dim,), jnp.float32)       # unused (static flag False)

    esize = jnp.dtype(compute_dtype).itemsize
    est = (4 * rows * dim * 4                                  # x + o (dbl buf)
           + 2 * (dim * 3 * inner + inner * dim) * esize       # weights (dbl buf)
           + rows * 3 * inner * 4                              # qkv value
           + rows * inner * (4 + esize)                        # ctx pieces
           + 2 * bb * seq_len * seq_len * 4)                   # sim / softmax
    kernel = functools.partial(attn_block_kernel, seq_len=seq_len, heads=heads,
                               dim_head=dim_head, fuse_norm_in=fuse_norm_in,
                               compute_dtype=compute_dtype,
                               approx_recip=approx_recip)
    return pl.pallas_call(
        kernel,
        out_shape=jax.ShapeDtypeStruct((rows_total, dim), x2d.dtype),
        grid=(nb,),
        in_specs=[
            pl.BlockSpec((rows, dim), lambda b: (b, 0)),            # x
            pl.BlockSpec((1, dim), lambda b: (0, 0)),               # g_in
            pl.BlockSpec((1, dim), lambda b: (0, 0)),               # g_pre
            pl.BlockSpec((dim, 3 * inner), lambda b: (0, 0)),       # w_qkv (once)
            pl.BlockSpec((inner, dim), lambda b: (0, 0)),           # w_out (once)
            pl.BlockSpec((1, dim), lambda b: (0, 0)),               # g_out
        ],
        out_specs=pl.BlockSpec((rows, dim), lambda b: (b, 0)),
        compiler_params=pltpu.CompilerParams(
            dimension_semantics=("parallel",),
            vmem_limit_bytes=_vmem_limit(est)),
    )(x2d, g_in.reshape(1, dim), p['g_pre'].reshape(1, dim),
      p['w_qkv'], p['w_out'], p['g_out'].reshape(1, dim))


def pallas_ff_block(x2d, seq_len, p, *, g_post=None, target_rows=512,
                    ff_block=None):
    rows_total, dim = x2d.shape
    ff_inner = p['w2'].shape[0]
    compute_dtype = p['w2'].dtype
    batch = rows_total // seq_len
    bb = _choose_batch_block(batch, seq_len, target_rows)
    rows = bb * seq_len
    nb = batch // bb
    ff_t = _choose_ff_block(ff_inner, ff_block)
    n_ff = ff_inner // ff_t
    fuse_norm_out = g_post is not None
    if g_post is None:
        g_post = jnp.ones((dim,), jnp.float32)     # unused (static flag False)

    esize = jnp.dtype(compute_dtype).itemsize
    est = (4 * rows * dim * 4                                  # x + o (dbl buf)
           + 2 * (2 * dim * ff_t + ff_t * dim) * esize         # weight tiles
           + rows * dim * (esize + 4)                          # normed + acc
           + 4 * rows * ff_t * 4)                              # xp/gate/hid
    kernel = functools.partial(ff_block_kernel, ff_inner=ff_inner,
                               fuse_norm_out=fuse_norm_out,
                               compute_dtype=compute_dtype)
    return pl.pallas_call(
        kernel,
        out_shape=jax.ShapeDtypeStruct((rows_total, dim), x2d.dtype),
        grid=(nb, n_ff),
        in_specs=[
            pl.BlockSpec((rows, dim), lambda b, k: (b, 0)),         # x
            pl.BlockSpec((1, dim), lambda b, k: (0, 0)),            # g_pre
            pl.BlockSpec((dim, ff_t), lambda b, k: (0, k)),         # w1 (value)
            pl.BlockSpec((dim, ff_t), lambda b, k: (0, k)),         # w1 (gate)
            pl.BlockSpec((1, ff_t), lambda b, k: (0, k)),           # g_mid tile
            pl.BlockSpec((ff_t, dim), lambda b, k: (k, 0)),         # w2 tile
            pl.BlockSpec((1, dim), lambda b, k: (0, 0)),            # g_mid @ w2
            pl.BlockSpec((1, dim), lambda b, k: (0, 0)),            # g_post
        ],
        out_specs=pl.BlockSpec((rows, dim), lambda b, k: (b, 0)),
        scratch_shapes=[
            pltpu.VMEM((rows, dim), compute_dtype),   # cached PreNorm(x)
            pltpu.VMEM((rows, dim), jnp.float32),     # w2 accumulator
            pltpu.VMEM((rows, 1), jnp.float32),       # running sum
            pltpu.VMEM((rows, 1), jnp.float32),       # running sum of squares
        ],
        compiler_params=pltpu.CompilerParams(
            dimension_semantics=("parallel", "arbitrary"),
            vmem_limit_bytes=_vmem_limit(est)),
    )(x2d, p['g_pre'].reshape(1, dim), p['w1x'], p['w1g'],
      p['g_mid'].reshape(1, ff_inner), p['w2'], p['gmid_w2'].reshape(1, dim),
      g_post.reshape(1, dim))


def transformer_forward(x, kparams, heads, dim_head, *, approx_recip=None,
                        target_rows=512, ff_block=None):
    B, N, D = x.shape
    x2d = x.reshape(B * N, D)                  # same HBM layout, 2-D view
    layers = kparams['layers']
    if approx_recip is None:
        approx_recip = bool(layers) and (
            jnp.dtype(layers[0]['attn']['w_qkv'].dtype) != jnp.dtype(jnp.float32))
    if not layers:
        x2d = pallas_layernorm(x2d, N, kparams['norm_in'],
                               target_rows=target_rows)
        x2d = pallas_layernorm(x2d, N, kparams['norm_out'],
                               target_rows=target_rows)
        return x2d.reshape(B, N, D)
    for i, layer in enumerate(layers):
        g_in = kparams['norm_in'] if i == 0 else None           # fuse norm_in
        x2d = pallas_attn_block(x2d, N, layer['attn'], heads, dim_head,
                                g_in=g_in, approx_recip=approx_recip,
                                target_rows=target_rows)
        g_post = kparams['norm_out'] if i == len(layers) - 1 else None
        x2d = pallas_ff_block(x2d, N, layer['ff'], g_post=g_post,
                              target_rows=target_rows, ff_block=ff_block)
    return x2d.reshape(B, N, D)


# ---------------------------- parameters / reference --------------------------

def init_params(key, dim, depth, heads, dim_head, ff_mult):
    """Parameters in the original (torch-equivalent) combined layout."""
    inner = heads * dim_head
    ff_inner = int(dim * ff_mult)

    def linear(k, fan_in, fan_out):
        bound = 1.0 / math.sqrt(fan_in)
        # (in, out) layout, i.e. transposed nn.Linear weight.
        return jax.random.uniform(k, (fan_in, fan_out), jnp.float32,
                                  -bound, bound)

    layers = []
    for _ in range(depth):
        k1, k2, k3, k4, key = jax.random.split(key, 5)
        layers.append({
            'attn': {
                'g_pre': jnp.ones((dim,), jnp.float32),
                'w_qkv': linear(k1, dim, inner * 3),
                'w_out': linear(k2, inner, dim),
                'g_out': jnp.ones((dim,), jnp.float32),
            },
            'ff': {
                'g_pre': jnp.ones((dim,), jnp.float32),
                'w1': linear(k3, dim, ff_inner * 2),
                'g_mid': jnp.ones((ff_inner,), jnp.float32),
                'w2': linear(k4, ff_inner, dim),
            },
        })
    return {
        'norm_in': jnp.ones((dim,), jnp.float32),
        'norm_out': jnp.ones((dim,), jnp.float32),
        'layers': layers,
    }


def prepare_kernel_params(params, heads, dim_head, compute_dtype=jnp.float32):
    """Fold the q-scale into w_qkv, split the GEGLU weight, precompute
    g_mid @ w2, and cast matmul weights to the compute dtype."""
    inner = heads * dim_head
    scale = dim_head ** -0.5
    out = {'norm_in': params['norm_in'], 'norm_out': params['norm_out'],
           'layers': []}
    for layer in params['layers']:
        a, f = layer['attn'], layer['ff']
        ff_inner = f['w2'].shape[0]
        w_qkv = a['w_qkv'].at[:, :inner].multiply(scale)       # fold q scale
        out['layers'].append({
            'attn': {
                'g_pre': a['g_pre'],
                'w_qkv': w_qkv.astype(compute_dtype),
                'w_out': a['w_out'].astype(compute_dtype),
                'g_out': a['g_out'],
            },
            'ff': {
                'g_pre': f['g_pre'],
                'w1x': f['w1'][:, :ff_inner].astype(compute_dtype),
                'w1g': f['w1'][:, ff_inner:].astype(compute_dtype),
                'g_mid': f['g_mid'],
                'w2': f['w2'].astype(compute_dtype),
                'gmid_w2': f['g_mid'] @ f['w2'],               # (dim,), f32
            },
        })
    return out


def _ref_ln(x, g, eps=EPS_F32):
    mean = x.mean(-1, keepdims=True)
    var = ((x - mean) ** 2).mean(-1, keepdims=True)
    return (x - mean) * jax.lax.rsqrt(var + eps) * g


def ref_forward(x, params, heads, dim_head):
    x = _ref_ln(x, params['norm_in'])
    inner = heads * dim_head
    for layer in params['layers']:
        a = layer['attn']
        n = _ref_ln(x, a['g_pre'])
        qkv = n @ a['w_qkv']
        q, k, v = (qkv[..., :inner], qkv[..., inner:2 * inner],
                   qkv[..., 2 * inner:])

        def split(t):
            B, N, _ = t.shape
            return t.reshape(B, N, heads, dim_head).transpose(0, 2, 1, 3)

        q, k, v = map(split, (q, k, v))
        q = q * dim_head ** -0.5
        sim = jnp.einsum('bhid,bhjd->bhij', q, k)
        attn = jax.nn.softmax(sim, axis=-1)
        out = jnp.einsum('bhij,bhjd->bhid', attn, v)
        B, H, N, Dh = out.shape
        out = out.transpose(0, 2, 1, 3).reshape(B, N, H * Dh)
        out = _ref_ln(out @ a['w_out'], a['g_out'])
        x = out + x

        f = layer['ff']
        n = _ref_ln(x, f['g_pre'])
        proj = n @ f['w1']
        fi = f['w2'].shape[0]
        h = proj[..., :fi] * jax.nn.gelu(proj[..., fi:], approximate=False)
        h = _ref_ln(h, f['g_mid'])
        x = h @ f['w2'] + x
    return _ref_ln(x, params['norm_out'])


# ----------------------------------- main -------------------------------------

if __name__ == "__main__":
    key = jax.random.PRNGKey(0)
    B, N, D = 2, 8, 64
    heads, dim_head, depth, ff_mult = 4, 32, 2, 4   # inner=128, ff_inner=256

    kx, kp = jax.random.split(key)
    x = jax.random.normal(kx, (B, N, D), jnp.float32)
    params = init_params(kp, D, depth, heads, dim_head, ff_mult)
    ref = ref_forward(x, params, heads, dim_head)

    # f32 run: strict parity with the module; ff_block=128 exercises the tiled
    # ff_inner reduction path (2 tiles) and the multi-batch-block grid.
    kparams_f32 = prepare_kernel_params(params, heads, dim_head)
    out_f32 = jax.block_until_ready(
        transformer_forward(x, kparams_f32, heads, dim_head, ff_block=128))
    err_f32 = float(jnp.max(jnp.abs(out_f32 - ref)))
    assert jnp.allclose(out_f32, ref, atol=1e-4, rtol=1e-4), err_f32

    # bf16 matmul-operand run (production path); looser tolerance since bf16
    # operands change results at the ~1e-2 level.
    kparams_bf16 = prepare_kernel_params(params, heads, dim_head,
                                         compute_dtype=jnp.bfloat16)
    out_bf16 = jax.block_until_ready(
        transformer_forward(x, kparams_bf16, heads, dim_head))
    err_bf16 = float(jnp.max(jnp.abs(out_bf16 - ref)))
    assert err_bf16 < 0.25, err_bf16

    print("KERNEL_OK")
</pallas_src>

<mosaic_0001>
module attributes {stable_mosaic.version = 11 : i64} {
  func.func @attn_block_kernel(%arg0: i32, %arg1: memref<8x64xf32, #tpu.memory_space<vmem>>, %arg2: memref<1x64xf32, #tpu.memory_space<vmem>>, %arg3: memref<1x64xf32, #tpu.memory_space<vmem>>, %arg4: memref<64x384xf32, #tpu.memory_space<vmem>>, %arg5: memref<128x64xf32, #tpu.memory_space<vmem>>, %arg6: memref<1x64xf32, #tpu.memory_space<vmem>>, %arg7: memref<8x64xf32, #tpu.memory_space<vmem>>) attributes {dimension_semantics = [#tpu.dimension_semantics<parallel>], iteration_bounds = array<i64: 2>, scalar_prefetch = 0 : i64, scratch_operands = 0 : i64, tpu.core_type = #tpu.core_type<tc>, window_params = [{transform_indices = @transform_0, window_bounds = array<i64: 8, 64>}, {pipeline_mode = #tpu.pipeline_mode<synchronous>, transform_indices = @transform_1, window_bounds = array<i64: 1, 64>}, {pipeline_mode = #tpu.pipeline_mode<synchronous>, transform_indices = @transform_2, window_bounds = array<i64: 1, 64>}, {pipeline_mode = #tpu.pipeline_mode<synchronous>, transform_indices = @transform_3, window_bounds = array<i64: 64, 384>}, {pipeline_mode = #tpu.pipeline_mode<synchronous>, transform_indices = @transform_4, window_bounds = array<i64: 128, 64>}, {pipeline_mode = #tpu.pipeline_mode<synchronous>, transform_indices = @transform_5, window_bounds = array<i64: 1, 64>}, {transform_indices = @transform_6, window_bounds = array<i64: 8, 64>}]} {
    %c0 = arith.constant 0 : index
    %c0_0 = arith.constant 0 : index
    %0 = vector.load %arg1[%c0, %c0_0] : memref<8x64xf32, #tpu.memory_space<vmem>>, vector<8x64xf32>
    %c0_1 = arith.constant 0 : index
    %c0_2 = arith.constant 0 : index
    %1 = vector.load %arg2[%c0_1, %c0_2] : memref<1x64xf32, #tpu.memory_space<vmem>>, vector<1x64xf32>
    %cst = arith.constant dense<0.000000e+00> : vector<8xf32>
    %2 = vector.multi_reduction <add>, %0, %cst [1] : vector<8x64xf32> to vector<8xf32>
    %3 = vector.shape_cast %2 : vector<8xf32> to vector<8x1xf32>
    %cst_3 = arith.constant 6.400000e+01 : f32
    %4 = vector.broadcast %cst_3 : f32 to vector<8x1xf32>
    %5 = arith.divf %3, %4 : vector<8x1xf32>
    %6 = vector.broadcast %5 : vector<8x1xf32> to vector<8x64xf32>
    %7 = arith.subf %0, %6 : vector<8x64xf32>
    %8 = arith.mulf %7, %7 : vector<8x64xf32>
    %cst_4 = arith.constant dense<0.000000e+00> : vector<8xf32>
    %9 = vector.multi_reduction <add>, %8, %cst_4 [1] : vector<8x64xf32> to vector<8xf32>
    %10 = vector.shape_cast %9 : vector<8xf32> to vector<8x1xf32>
    %cst_5 = arith.constant 6.400000e+01 : f32
    %11 = vector.broadcast %cst_5 : f32 to vector<8x1xf32>
    %12 = arith.divf %10, %11 : vector<8x1xf32>
    %13 = vector.broadcast %5 : vector<8x1xf32> to vector<8x64xf32>
    %14 = arith.subf %0, %13 : vector<8x64xf32>
    %cst_6 = arith.constant 9.99999974E-6 : f32
    %15 = vector.broadcast %cst_6 : f32 to vector<8x1xf32>
    %16 = arith.addf %12, %15 : vector<8x1xf32>
    %17 = math.rsqrt %16 : vector<8x1xf32>
    %18 = vector.broadcast %17 : vector<8x1xf32> to vector<8x64xf32>
    %19 = arith.mulf %14, %18 : vector<8x64xf32>
    %20 = vector.broadcast %1 : vector<1x64xf32> to vector<8x64xf32>
    %21 = arith.mulf %19, %20 : vector<8x64xf32>
    %c0_7 = arith.constant 0 : index
    %c0_8 = arith.constant 0 : index
    %22 = vector.load %arg3[%c0_7, %c0_8] : memref<1x64xf32, #tpu.memory_space<vmem>>, vector<1x64xf32>
    %cst_9 = arith.constant dense<0.000000e+00> : vector<8xf32>
    %23 = vector.multi_reduction <add>, %21, %cst_9 [1] : vector<8x64xf32> to vector<8xf32>
    %24 = vector.shape_cast %23 : vector<8xf32> to vector<8x1xf32>
    %cst_10 = arith.constant 6.400000e+01 : f32
    %25 = vector.broadcast %cst_10 : f32 to vector<8x1xf32>
    %26 = arith.divf %24, %25 : vector<8x1xf32>
    %27 = vector.broadcast %26 : vector<8x1xf32> to vector<8x64xf32>
    %28 = arith.subf %21, %27 : vector<8x64xf32>
    %29 = arith.mulf %28, %28 : vector<8x64xf32>
    %cst_11 = arith.constant dense<0.000000e+00> : vector<8xf32>
    %30 = vector.multi_reduction <add>, %29, %cst_11 [1] : vector<8x64xf32> to vector<8xf32>
    %31 = vector.shape_cast %30 : vector<8xf32> to vector<8x1xf32>
    %cst_12 = arith.constant 6.400000e+01 : f32
    %32 = vector.broadcast %cst_12 : f32 to vector<8x1xf32>
    %33 = arith.divf %31, %32 : vector<8x1xf32>
    %34 = vector.broadcast %26 : vector<8x1xf32> to vector<8x64xf32>
    %35 = arith.subf %21, %34 : vector<8x64xf32>
    %cst_13 = arith.constant 9.99999974E-6 : f32
    %36 = vector.broadcast %cst_13 : f32 to vector<8x1xf32>
    %37 = arith.addf %33, %36 : vector<8x1xf32>
    %38 = math.rsqrt %37 : vector<8x1xf32>
    %39 = vector.broadcast %38 : vector<8x1xf32> to vector<8x64xf32>
    %40 = arith.mulf %35, %39 : vector<8x64xf32>
    %41 = vector.broadcast %22 : vector<1x64xf32> to vector<8x64xf32>
    %42 = arith.mulf %40, %41 : vector<8x64xf32>
    %c0_14 = arith.constant 0 : index
    %c0_15 = arith.constant 0 : index
    %43 = vector.load %arg4[%c0_14, %c0_15] : memref<64x384xf32, #tpu.memory_space<vmem>>, vector<64x384xf32>
    %cst_16 = arith.constant dense<0.000000e+00> : vector<8x384xf32>
    %44 = tpu.matmul %42, %43, %cst_16 {dimension_numbers = #tpu.dot_dimension_numbers<[1], [0], [0], [1], [0, 0, 1, 1], [], []>} : vector<8x64xf32>, vector<64x384xf32>, vector<8x384xf32> -> vector<8x384xf32>
    %45 = vector.shape_cast %44 : vector<8x384xf32> to vector<1x8x384xf32>
    %46 = vector.extract_strided_slice %45 {offsets = [0, 0, 0], sizes = [1, 8, 32], strides = [1, 1, 1]} : vector<1x8x384xf32> to vector<1x8x32xf32>
    %47 = vector.extract_strided_slice %45 {offsets = [0, 0, 128], sizes = [1, 8, 32], strides = [1, 1, 1]} : vector<1x8x384xf32> to vector<1x8x32xf32>
    %48 = vector.extract_strided_slice %45 {offsets = [0, 0, 256], sizes = [1, 8, 32], strides = [1, 1, 1]} : vector<1x8x384xf32> to vector<1x8x32xf32>
    "tpu.trace_start"() <{level = 10 : i32, message = "bid,bjd->bij"}> : () -> ()
    %cst_17 = arith.constant dense<0.000000e+00> : vector<1x8x8xf32>
    %49 = tpu.matmul %46, %47, %cst_17 {dimension_numbers = #tpu.dot_dimension_numbers<[2], [2], [1], [1], [0, 0, 0, 1, 1, 1], [0], [0]>} : vector<1x8x32xf32>, vector<1x8x32xf32>, vector<1x8x8xf32> -> vector<1x8x8xf32>
    "tpu.trace_stop"() : () -> ()
    %cst_18 = arith.constant dense<0xFF800000> : vector<1x8xf32>
    %50 = vector.multi_reduction <maximumf>, %49, %cst_18 [2] : vector<1x8x8xf32> to vector<1x8xf32>
    %51 = vector.shape_cast %50 : vector<1x8xf32> to vector<1x8x1xf32>
    %52 = vector.broadcast %51 : vector<1x8x1xf32> to vector<1x8x8xf32>
    %53 = arith.subf %49, %52 : vector<1x8x8xf32>
    %54 = math.exp %53 : vector<1x8x8xf32>
    %cst_19 = arith.constant dense<0.000000e+00> : vector<1x8xf32>
    %55 = vector.multi_reduction <add>, %54, %cst_19 [2] : vector<1x8x8xf32> to vector<1x8xf32>
    %56 = vector.shape_cast %55 : vector<1x8xf32> to vector<1x8x1xf32>
    %57 = tpu.reciprocal %56 : vector<1x8x1xf32> -> vector<1x8x1xf32>
    %58 = vector.broadcast %57 : vector<1x8x1xf32> to vector<1x8x8xf32>
    %59 = arith.mulf %54, %58 : vector<1x8x8xf32>
    "tpu.trace_start"() <{level = 10 : i32, message = "bij,bjd->bid"}> : () -> ()
    %cst_20 = arith.constant dense<0.000000e+00> : vector<1x8x32xf32>
    %60 = tpu.matmul %59, %48, %cst_20 {dimension_numbers = #tpu.dot_dimension_numbers<[2], [1], [1], [2], [0, 0, 0, 1, 1, 2], [0], [0]>} : vector<1x8x8xf32>, vector<1x8x32xf32>, vector<1x8x32xf32> -> vector<1x8x32xf32>
    "tpu.trace_stop"() : () -> ()
    %61 = vector.extract_strided_slice %45 {offsets = [0, 0, 32], sizes = [1, 8, 32], strides = [1, 1, 1]} : vector<1x8x384xf32> to vector<1x8x32xf32>
    %62 = vector.extract_strided_slice %45 {offsets = [0, 0, 160], sizes = [1, 8, 32], strides = [1, 1, 1]} : vector<1x8x384xf32> to vector<1x8x32xf32>
    %63 = vector.extract_strided_slice %45 {offsets = [0, 0, 288], sizes = [1, 8, 32], strides = [1, 1, 1]} : vector<1x8x384xf32> to vector<1x8x32xf32>
    "tpu.trace_start"() <{level = 10 : i32, message = "bid,bjd->bij"}> : () -> ()
    %cst_21 = arith.constant dense<0.000000e+00> : vector<1x8x8xf32>
    %64 = tpu.matmul %61, %62, %cst_21 {dimension_numbers = #tpu.dot_dimension_numbers<[2], [2], [1], [1], [0, 0, 0, 1, 1, 1], [0], [0]>} : vector<1x8x32xf32>, vector<1x8x32xf32>, vector<1x8x8xf32> -> vector<1x8x8xf32>
    "tpu.trace_stop"() : () -> ()
    %cst_22 = arith.constant dense<0xFF800000> : vector<1x8xf32>
    %65 = vector.multi_reduction <maximumf>, %64, %cst_22 [2] : vector<1x8x8xf32> to vector<1x8xf32>
    %66 = vector.shape_cast %65 : vector<1x8xf32> to vector<1x8x1xf32>
    %67 = vector.broadcast %66 : vector<1x8x1xf32> to vector<1x8x8xf32>
    %68 = arith.subf %64, %67 : vector<1x8x8xf32>
    %69 = math.exp %68 : vector<1x8x8xf32>
    %cst_23 = arith.constant dense<0.000000e+00> : vector<1x8xf32>
    %70 = vector.multi_reduction <add>, %69, %cst_23 [2] : vector<1x8x8xf32> to vector<1x8xf32>
    %71 = vector.shape_cast %70 : vector<1x8xf32> to vector<1x8x1xf32>
    %72 = tpu.reciprocal %71 : vector<1x8x1xf32> -> vector<1x8x1xf32>
    %73 = vector.broadcast %72 : vector<1x8x1xf32> to vector<1x8x8xf32>
    %74 = arith.mulf %69, %73 : vector<1x8x8xf32>
    "tpu.trace_start"() <{level = 10 : i32, message = "bij,bjd->bid"}> : () -> ()
    %cst_24 = arith.constant dense<0.000000e+00> : vector<1x8x32xf32>
    %75 = tpu.matmul %74, %63, %cst_24 {dimension_numbers = #tpu.dot_dimension_numbers<[2], [1], [1], [2], [0, 0, 0, 1, 1, 2], [0], [0]>} : vector<1x8x8xf32>, vector<1x8x32xf32>, vector<1x8x32xf32> -> vector<1x8x32xf32>
    "tpu.trace_stop"() : () -> ()
    %76 = vector.extract_strided_slice %45 {offsets = [0, 0, 64], sizes = [1, 8, 32], strides = [1, 1, 1]} : vector<1x8x384xf32> to vector<1x8x32xf32>
    %77 = vector.extract_strided_slice %45 {offsets = [0, 0, 192], sizes = [1, 8, 32], strides = [1, 1, 1]} : vector<1x8x384xf32> to vector<1x8x32xf32>
    %78 = vector.extract_strided_slice %45 {offsets = [0, 0, 320], sizes = [1, 8, 32], strides = [1, 1, 1]} : vector<1x8x384xf32> to vector<1x8x32xf32>
    "tpu.trace_start"() <{level = 10 : i32, message = "bid,bjd->bij"}> : () -> ()
    %cst_25 = arith.constant dense<0.000000e+00> : vector<1x8x8xf32>
    %79 = tpu.matmul %76, %77, %cst_25 {dimension_numbers = #tpu.dot_dimension_numbers<[2], [2], [1], [1], [0, 0, 0, 1, 1, 1], [0], [0]>} : vector<1x8x32xf32>, vector<1x8x32xf32>, vector<1x8x8xf32> -> vector<1x8x8xf32>
    "tpu.trace_stop"() : () -> ()
    %cst_26 = arith.constant dense<0xFF800000> : vector<1x8xf32>
    %80 = vector.multi_reduction <maximumf>, %79, %cst_26 [2] : vector<1x8x8xf32> to vector<1x8xf32>
    %81 = vector.shape_cast %80 : vector<1x8xf32> to vector<1x8x1xf32>
    %82 = vector.broadcast %81 : vector<1x8x1xf32> to vector<1x8x8xf32>
    %83 = arith.subf %79, %82 : vector<1x8x8xf32>
    %84 = math.exp %83 : vector<1x8x8xf32>
    %cst_27 = arith.constant dense<0.000000e+00> : vector<1x8xf32>
    %85 = vector.multi_reduction <add>, %84, %cst_27 [2] : vector<1x8x8xf32> to vector<1x8xf32>
    %86 = vector.shape_cast %85 : vector<1x8xf32> to vector<1x8x1xf32>
    %87 = tpu.reciprocal %86 : vector<1x8x1xf32> -> vector<1x8x1xf32>
    %88 = vector.broadcast %87 : vector<1x8x1xf32> to vector<1x8x8xf32>
    %89 = arith.mulf %84, %88 : vector<1x8x8xf32>
    "tpu.trace_start"() <{level = 10 : i32, message = "bij,bjd->bid"}> : () -> ()
    %cst_28 = arith.constant dense<0.000000e+00> : vector<1x8x32xf32>
    %90 = tpu.matmul %89, %78, %cst_28 {dimension_numbers = #tpu.dot_dimension_numbers<[2], [1], [1], [2], [0, 0, 0, 1, 1, 2], [0], [0]>} : vector<1x8x8xf32>, vector<1x8x32xf32>, vector<1x8x32xf32> -> vector<1x8x32xf32>
    "tpu.trace_stop"() : () -> ()
    %91 = vector.extract_strided_slice %45 {offsets = [0, 0, 96], sizes = [1, 8, 32], strides = [1, 1, 1]} : vector<1x8x384xf32> to vector<1x8x32xf32>
    %92 = vector.extract_strided_slice %45 {offsets = [0, 0, 224], sizes = [1, 8, 32], strides = [1, 1, 1]} : vector<1x8x384xf32> to vector<1x8x32xf32>
    %93 = vector.extract_strided_slice %45 {offsets = [0, 0, 352], sizes = [1, 8, 32], strides = [1, 1, 1]} : vector<1x8x384xf32> to vector<1x8x32xf32>
    "tpu.trace_start"() <{level = 10 : i32, message = "bid,bjd->bij"}> : () -> ()
    %cst_29 = arith.constant dense<0.000000e+00> : vector<1x8x8xf32>
    %94 = tpu.matmul %91, %92, %cst_29 {dimension_numbers = #tpu.dot_dimension_numbers<[2], [2], [1], [1], [0, 0, 0, 1, 1, 1], [0], [0]>} : vector<1x8x32xf32>, vector<1x8x32xf32>, vector<1x8x8xf32> -> vector<1x8x8xf32>
    "tpu.trace_stop"() : () -> ()
    %cst_30 = arith.constant dense<0xFF800000> : vector<1x8xf32>
    %95 = vector.multi_reduction <maximumf>, %94, %cst_30 [2] : vector<1x8x8xf32> to vector<1x8xf32>
    %96 = vector.shape_cast %95 : vector<1x8xf32> to vector<1x8x1xf32>
    %97 = vector.broadcast %96 : vector<1x8x1xf32> to vector<1x8x8xf32>
    %98 = arith.subf %94, %97 : vector<1x8x8xf32>
    %99 = math.exp %98 : vector<1x8x8xf32>
    %cst_31 = arith.constant dense<0.000000e+00> : vector<1x8xf32>
    %100 = vector.multi_reduction <add>, %99, %cst_31 [2] : vector<1x8x8xf32> to vector<1x8xf32>
    %101 = vector.shape_cast %100 : vector<1x8xf32> to vector<1x8x1xf32>
    %102 = tpu.reciprocal %101 : vector<1x8x1xf32> -> vector<1x8x1xf32>
    %103 = vector.broadcast %102 : vector<1x8x1xf32> to vector<1x8x8xf32>
    %104 = arith.mulf %99, %103 : vector<1x8x8xf32>
    "tpu.trace_start"() <{level = 10 : i32, message = "bij,bjd->bid"}> : () -> ()
    %cst_32 = arith.constant dense<0.000000e+00> : vector<1x8x32xf32>
    %105 = tpu.matmul %104, %93, %cst_32 {dimension_numbers = #tpu.dot_dimension_numbers<[2], [1], [1], [2], [0, 0, 0, 1, 1, 2], [0], [0]>} : vector<1x8x8xf32>, vector<1x8x32xf32>, vector<1x8x32xf32> -> vector<1x8x32xf32>
    "tpu.trace_stop"() : () -> ()
    %106 = tpu.concatenate %60, %75, %90, %105 in 2 : vector<1x8x32xf32>, vector<1x8x32xf32>, vector<1x8x32xf32>, vector<1x8x32xf32> -> vector<1x8x128xf32>
    %107 = vector.shape_cast %106 : vector<1x8x128xf32> to vector<8x128xf32>
    %c0_33 = arith.constant 0 : index
    %c0_34 = arith.constant 0 : index
    %108 = vector.load %arg5[%c0_33, %c0_34] : memref<128x64xf32, #tpu.memory_space<vmem>>, vector<128x64xf32>
    %cst_35 = arith.constant dense<0.000000e+00> : vector<8x64xf32>
    %109 = tpu.matmul %107, %108, %cst_35 {dimension_numbers = #tpu.dot_dimension_numbers<[1], [0], [0], [1], [0, 0, 1, 1], [], []>} : vector<8x128xf32>, vector<128x64xf32>, vector<8x64xf32> -> vector<8x64xf32>
    %c0_36 = arith.constant 0 : index
    %c0_37 = arith.constant 0 : index
    %110 = vector.load %arg6[%c0_36, %c0_37] : memref<1x64xf32, #tpu.memory_space<vmem>>, vector<1x64xf32>
    %cst_38 = arith.constant dense<0.000000e+00> : vector<8xf32>
    %111 = vector.multi_reduction <add>, %109, %cst_38 [1] : vector<8x64xf32> to vector<8xf32>
    %112 = vector.shape_cast %111 : vector<8xf32> to vector<8x1xf32>
    %cst_39 = arith.constant 6.400000e+01 : f32
    %113 = vector.broadcast %cst_39 : f32 to vector<8x1xf32>
    %114 = arith.divf %112, %113 : vector<8x1xf32>
    %115 = vector.broadcast %114 : vector<8x1xf32> to vector<8x64xf32>
    %116 = arith.subf %109, %115 : vector<8x64xf32>
    %117 = arith.mulf %116, %116 : vector<8x64xf32>
    %cst_40 = arith.constant dense<0.000000e+00> : vector<8xf32>
    %118 = vector.multi_reduction <add>, %117, %cst_40 [1] : vector<8x64xf32> to vector<8xf32>
    %119 = vector.shape_cast %118 : vector<8xf32> to vector<8x1xf32>
    %cst_41 = arith.constant 6.400000e+01 : f32
    %120 = vector.broadcast %cst_41 : f32 to vector<8x1xf32>
    %121 = arith.divf %119, %120 : vector<8x1xf32>
    %122 = vector.broadcast %114 : vector<8x1xf32> to vector<8x64xf32>
    %123 = arith.subf %109, %122 : vector<8x64xf32>
    %cst_42 = arith.constant 9.99999974E-6 : f32
    %124 = vector.broadcast %cst_42 : f32 to vector<8x1xf32>
    %125 = arith.addf %121, %124 : vector<8x1xf32>
    %126 = math.rsqrt %125 : vector<8x1xf32>
    %127 = vector.broadcast %126 : vector<8x1xf32> to vector<8x64xf32>
    %128 = arith.mulf %123, %127 : vector<8x64xf32>
    %129 = vector.broadcast %110 : vector<1x64xf32> to vector<8x64xf32>
    %130 = arith.mulf %128, %129 : vector<8x64xf32>
    %131 = arith.addf %130, %21 : vector<8x64xf32>
    %c0_43 = arith.constant 0 : index
    %c0_44 = arith.constant 0 : index
    %132 = vector.load %arg7[%c0_43, %c0_44] : memref<8x64xf32, #tpu.memory_space<vmem>>, vector<8x64xf32>
    tpu.vector_store %arg7[%c0_43, %c0_44], %131 {strides = array<i32>} : memref<8x64xf32, #tpu.memory_space<vmem>>, vector<8x64xf32>,
    return
  }
  func.func @transform_0(%arg0: i32) -> (i32, i32) {
    %c0_i32 = arith.constant 0 : i32
    %c0_i32_0 = arith.constant 0 : i32
    return %arg0, %c0_i32 : i32, i32
  }
  func.func @transform_1(%arg0: i32) -> (i32, i32) {
    %c0_i32 = arith.constant 0 : i32
    %c0_i32_0 = arith.constant 0 : i32
    %c0_i32_1 = arith.constant 0 : i32
    return %c0_i32, %c0_i32_0 : i32, i32
  }
  func.func @transform_2(%arg0: i32) -> (i32, i32) {
    %c0_i32 = arith.constant 0 : i32
    %c0_i32_0 = arith.constant 0 : i32
    %c0_i32_1 = arith.constant 0 : i32
    return %c0_i32, %c0_i32_0 : i32, i32
  }
  func.func @transform_3(%arg0: i32) -> (i32, i32) {
    %c0_i32 = arith.constant 0 : i32
    %c0_i32_0 = arith.constant 0 : i32
    %c0_i32_1 = arith.constant 0 : i32
    return %c0_i32, %c0_i32_0 : i32, i32
  }
  func.func @transform_4(%arg0: i32) -> (i32, i32) {
    %c0_i32 = arith.constant 0 : i32
    %c0_i32_0 = arith.constant 0 : i32
    %c0_i32_1 = arith.constant 0 : i32
    return %c0_i32, %c0_i32_0 : i32, i32
  }
  func.func @transform_5(%arg0: i32) -> (i32, i32) {
    %c0_i32 = arith.constant 0 : i32
    %c0_i32_0 = arith.constant 0 : i32
    %c0_i32_1 = arith.constant 0 : i32
    return %c0_i32, %c0_i32_0 : i32, i32
  }
  func.func @transform_6(%arg0: i32) -> (i32, i32) {
    %c0_i32 = arith.constant 0 : i32
    %c0_i32_0 = arith.constant 0 : i32
    return %arg0, %c0_i32 : i32, i32
  }
}

</mosaic_0001>

<llo_original>
// kernel: tpu_custom_call.1
$region0: #{tpu_custom_call.1}
  #allocation0 [shape = 'u32[]', space=smem, size = 0x4, offset = 0x4, fixed_abs, tag = 'smem constant byte address 0x4 - core index']
  #allocation1 [shape = 'u32[72,128]{1,0:T(1,128)}', space=vmem, size = 0x9000, scoped, tag = 'internal scratch']
  %s0 = inlined_call_operand.hbm [shape: f32[16,64], index: 0, kind: input, shape index: {}]
  %s1 = inlined_call_operand.vmem [shape: f32[1,64], index: 1, kind: input, shape index: {}]
  %s2 = inlined_call_operand.vmem [shape: f32[1,64], index: 2, kind: input, shape index: {}]
  %s3 = inlined_call_operand.vmem [shape: f32[64,384], index: 3, kind: input, shape index: {}]
  %s4 = inlined_call_operand.vmem [shape: f32[128,64], index: 4, kind: input, shape index: {}]
  %s5 = inlined_call_operand.hbm [shape: f32[1,64], index: 5, kind: input, shape index: {}]
  %s6 = inlined_call_operand.hbm [shape: f32[16,64], index: 6, kind: output, shape index: {}]
  %s7 = sld [smem:[#allocation0]]
  $region65: #{tpu_custom_call.1} parent=0
    _
  %s9 = ssub.s32 1, %s7
  %s10 = scalar_select 0, %s9, %s7
  $region1: #{tpu_custom_call.1} parent=0
    #allocation2 [shape = 'u8[8192]{0}', space=vmem, size = 0x2000, scoped, tag = 'input window, operand 0']
    #allocation3 [shape = 's32[2]{0}', space=sflag, size = 0x8, scoped, tag = 'scoped memory for tpu_custom_call.1']
    #allocation4 [shape = 's32[2]{0}', space=sflag, size = 0x8, scoped, tag = 'scoped memory for tpu_custom_call.1']
    #allocation5 [shape = 'u8[512]{0}', space=vmem, size = 0x400, scoped, tag = 'input window, operand 5, single buffered']
    #allocation6 [shape = 's32[1]{0}', space=sflag, size = 0x4, scoped, tag = 'scoped memory for tpu_custom_call.1']
    #allocation7 [shape = 'u8[8192]{0}', space=vmem, size = 0x2000, scoped, tag = 'output window, operand 0']
    %11 = vsyncpa [#allocation3], 0
    %s12 = scalar_lea.sflag [#allocation3], 1
    %13 = vsyncpa %s12, 0
    %14 = vsyncpa [#allocation6], 0
    %15 = vsyncpa [#allocation4], 0
    %s16 = scalar_lea.sflag [#allocation4], 1
    %17 = vsyncpa %s16, 0
    loop: start=0, step=1, limit=4
    $region2: #{tpu_custom_call.1} parent=1 // loop_pre_header
      _
    $region3: #{tpu_custom_call.1} parent=1 // loop_header
      %s19 = sphi 0, %s23
      %p20 = scmp.ge.s32.totalorder %s19, 4
      %s29 = sphi 0, %s31
      %s32 = sphi 0, %s29
      %s33 = sphi 0, %s32
      %s49 = sphi 0, %s33
      %s53 = sphi 0, %s53
      %s55 = sphi 0, %s53
      %s56 = sphi 0, %s55
      %s70 = sphi 0, %s56
      %s74 = sphi 0, %s74
      %s76 = sphi 0, %s74
      %s77 = sphi 0, %s76
      %s91 = sphi 0, %s77
      %s95 = sphi 0, %s95
      %s97 = sphi 0, %s95
      %s98 = sphi 0, %s97
      %s112 = sphi 0, %s98
      %s116 = sphi 0, %s116
      %s118 = sphi 0, %s116
      %s119 = sphi 0, %s118
      %s133 = sphi 0, %s119
      %s137 = sphi 0, %s137
      %s139 = sphi 0, %s137
      %s140 = sphi 0, %s139
      %s154 = sphi 0, %s140
      %s160 = sphi 0, %s162
      %s163 = sphi 0, %s160
      %s164 = sphi 0, %s163
      %s180 = sphi 0, %s164
    $region4: #{tpu_custom_call.1} parent=1 // loop_header_branch
      %22 = sbr.rel (%p20) target = $region8
    $region5: #{tpu_custom_call.1} parent=1 // loop_body
      %s24 = ssub.s32 %s19, 1
      %s25 = ssub.s32 %s19, 2
      %s26 = sadd.s32 %s19, 1
      %s27 = ssub.s32 %s19, %s26
      %p28 = scmp.eq.s32.totalorder %s27, 0
      %s30 = sadd.s32 %s29, 1
      %s31 = scalar_select %p28, %s29, %s30
      %p34 = pneg %p28
      %p35 = scmp.eq.s32.totalorder %s19, 1
      %p36 = por %p34, %p35
      %p37 = scmp.ne.s32.totalorder %s29, %s32
      %p38 = scmp.eq.s32.totalorder %s19, 0
      %p39 = por %p37, %p38
      %p40 = scmp.ne.s32.totalorder %s29, %s32
      %p41 = scmp.eq.s32.totalorder %s24, 1
      %p42 = por %p40, %p41
      %p43 = scmp.ne.s32.totalorder %s32, %s33
      %p44 = scmp.eq.s32.totalorder %s24, 0
      %p45 = por %p43, %p44
      %p46 = scmp.ne.s32.totalorder %s32, %s33
      %p47 = scmp.eq.s32.totalorder %s25, 1
      %p48 = por %p46, %p47
      %p50 = scmp.ne.s32.totalorder %s33, %s49
      %p51 = scmp.eq.s32.totalorder %s25, 0
      %p52 = por %p50, %p51
      %s54 = sadd.s32 %s53, 1
      %p57 = scmp.eq.s32.totalorder %s19, 1
      %p58 = scmp.ne.s32.totalorder %s53, %s55
      %p59 = scmp.eq.s32.totalorder %s19, 0
      %p60 = por %p58, %p59
      %p61 = scmp.ne.s32.totalorder %s53, %s55
      %p62 = scmp.eq.s32.totalorder %s24, 1
      %p63 = por %p61, %p62
      %p64 = scmp.ne.s32.totalorder %s55, %s56
      %p65 = scmp.eq.s32.totalorder %s24, 0
      %p66 = por %p64, %p65
      %p67 = scmp.ne.s32.totalorder %s55, %s56
      %p68 = scmp.eq.s32.totalorder %s25, 1
      %p69 = por %p67, %p68
      %p71 = scmp.ne.s32.totalorder %s56, %s70
      %p72 = scmp.eq.s32.totalorder %s25, 0
      %p73 = por %p71, %p72
      %s75 = sadd.s32 %s74, 1
      %p78 = scmp.eq.s32.totalorder %s19, 1
      %p79 = scmp.ne.s32.totalorder %s74, %s76
      %p80 = scmp.eq.s32.totalorder %s19, 0
      %p81 = por %p79, %p80
      %p82 = scmp.ne.s32.totalorder %s74, %s76
      %p83 = scmp.eq.s32.totalorder %s24, 1
      %p84 = por %p82, %p83
      %p85 = scmp.ne.s32.totalorder %s76, %s77
      %p86 = scmp.eq.s32.totalorder %s24, 0
      %p87 = por %p85, %p86
      %p88 = scmp.ne.s32.totalorder %s76, %s77
      %p89 = scmp.eq.s32.totalorder %s25, 1
      %p90 = por %p88, %p89
      %p92 = scmp.ne.s32.totalorder %s77, %s91
      %p93 = scmp.eq.s32.totalorder %s25, 0
      %p94 = por %p92, %p93
      %s96 = sadd.s32 %s95, 1
      %p99 = scmp.eq.s32.totalorder %s19, 1
      %p100 = scmp.ne.s32.totalorder %s95, %s97
      %p101 = scmp.eq.s32.totalorder %s19, 0
      %p102 = por %p100, %p101
      %p103 = scmp.ne.s32.totalorder %s95, %s97
      %p104 = scmp.eq.s32.totalorder %s24, 1
      %p105 = por %p103, %p104
      %p106 = scmp.ne.s32.totalorder %s97, %s98
      %p107 = scmp.eq.s32.totalorder %s24, 0
      %p108 = por %p106, %p107
      %p109 = scmp.ne.s32.totalorder %s97, %s98
      %p110 = scmp.eq.s32.totalorder %s25, 1
      %p111 = por %p109, %p110
      %p113 = scmp.ne.s32.totalorder %s98, %s112
      %p114 = scmp.eq.s32.totalorder %s25, 0
      %p115 = por %p113, %p114
      %s117 = sadd.s32 %s116, 1
      %p120 = scmp.eq.s32.totalorder %s19, 1
      %p121 = scmp.ne.s32.totalorder %s116, %s118
      %p122 = scmp.eq.s32.totalorder %s19, 0
      %p123 = por %p121, %p122
      %p124 = scmp.ne.s32.totalorder %s116, %s118
      %p125 = scmp.eq.s32.totalorder %s24, 1
      %p126 = por %p124, %p125
      %p127 = scmp.ne.s32.totalorder %s118, %s119
      %p128 = scmp.eq.s32.totalorder %s24, 0
      %p129 = por %p127, %p128
      %p130 = scmp.ne.s32.totalorder %s118, %s119
      %p131 = scmp.eq.s32.totalorder %s25, 1
      %p132 = por %p130, %p131
      %p134 = scmp.ne.s32.totalorder %s119, %s133
      %p135 = scmp.eq.s32.totalorder %s25, 0
      %p136 = por %p134, %p135
      %s138 = sadd.s32 %s137, 1
      %p141 = scmp.eq.s32.totalorder %s19, 1
      %p142 = scmp.ne.s32.totalorder %s137, %s139
      %p143 = scmp.eq.s32.totalorder %s19, 0
      %p144 = por %p142, %p143
      %p145 = scmp.ne.s32.totalorder %s137, %s139
      %p146 = scmp.eq.s32.totalorder %s24, 1
      %p147 = por %p145, %p146
      %p148 = scmp.ne.s32.totalorder %s139, %s140
      %p149 = scmp.eq.s32.totalorder %s24, 0
      %p150 = por %p148, %p149
      %p151 = scmp.ne.s32.totalorder %s139, %s140
      %p152 = scmp.eq.s32.totalorder %s25, 1
      %p153 = por %p151, %p152
      %p155 = scmp.ne.s32.totalorder %s140, %s154
      %p156 = scmp.eq.s32.totalorder %s25, 0
      %p157 = por %p155, %p156
      %s158 = ssub.s32 %s19, %s26
      %p159 = scmp.eq.s32.totalorder %s158, 0
      %s161 = sadd.s32 %s160, 1
      %s162 = scalar_select %p159, %s160, %s161
      %p165 = pneg %p159
      %p166 = scmp.eq.s32.totalorder %s19, 1
      %p167 = por %p165, %p166
      %p168 = scmp.ne.s32.totalorder %s160, %s163
      %p169 = scmp.eq.s32.totalorder %s19, 0
      %p170 = por %p168, %p169
      %p171 = scmp.ne.s32.totalorder %s160, %s163
      %p172 = scmp.eq.s32.totalorder %s24, 1
      %p173 = por %p171, %p172
      %p174 = scmp.ne.s32.totalorder %s163, %s164
      %p175 = scmp.eq.s32.totalorder %s24, 0
      %p176 = por %p174, %p175
      %p177 = scmp.ne.s32.totalorder %s163, %s164
      %p178 = scmp.eq.s32.totalorder %s25, 1
      %p179 = por %p177, %p178
      %p181 = scmp.ne.s32.totalorder %s164, %s180
      %p182 = scmp.eq.s32.totalorder %s25, 0
      %p183 = por %p181, %p182
      %p184 = scmp.le.s32.totalorder 1, %s19
      %p185 = scmp.lt.s32.totalorder %s19, 3
      %p186 = pnand %p184, %p185
      %p187 = pneg %p186
      // Predicated region
      $region9: #{tpu_custom_call.1} parent=5 // pred_check
        _
      $region10: #{tpu_custom_call.1} parent=5 // pred_check_branch
        %189 = sbr.rel (%p186) target = $region12
      $region11: #{tpu_custom_call.1} parent=5 // pred_region
        %s190 = ssub.s32 %s19, 1
        // Predicated region
        $region13: #{tpu_custom_call.1} parent=11 // pred_check
          %p191 = pneg %p66
        $region14: #{tpu_custom_call.1} parent=11 // pred_check_branch
          %193 = sbr.rel (%p191) target = $region16
        $region15: #{tpu_custom_call.1} parent=11 // pred_region
          _
        $region16: #{tpu_custom_call.1} parent=11 // pred_fallthru
          _
        // Predicated region
        $region17: #{tpu_custom_call.1} parent=11 // pred_check
          %p194 = pneg %p87
        $region18: #{tpu_custom_call.1} parent=11 // pred_check_branch
          %196 = sbr.rel (%p194) target = $region20
        $region19: #{tpu_custom_call.1} parent=11 // pred_region
          _
        $region20: #{tpu_custom_call.1} parent=11 // pred_fallthru
          _
        // Predicated region
        $region21: #{tpu_custom_call.1} parent=11 // pred_check
          %p197 = pneg %p108
        $region22: #{tpu_custom_call.1} parent=11 // pred_check_branch
          %199 = sbr.rel (%p197) target = $region24
        $region23: #{tpu_custom_call.1} parent=11 // pred_region
          _
        $region24: #{tpu_custom_call.1} parent=11 // pred_fallthru
          _
        // Predicated region
        $region25: #{tpu_custom_call.1} parent=11 // pred_check
          %p200 = pneg %p129
        $region26: #{tpu_custom_call.1} parent=11 // pred_check_branch
          %202 = sbr.rel (%p200) target = $region28
        $region27: #{tpu_custom_call.1} parent=11 // pred_region
          _
        $region28: #{tpu_custom_call.1} parent=11 // pred_fallthru
          _
        // Predicated region
        $region29: #{tpu_custom_call.1} parent=11 // pred_check
          %p203 = pneg %p150
        $region30: #{tpu_custom_call.1} parent=11 // pred_check_branch
          %205 = sbr.rel (%p203) target = $region32
        $region31: #{tpu_custom_call.1} parent=11 // pred_region
          %207 = vsyncadd [#allocation6], 0
          %s209 = sshll.u32 %s5, 4
          %s210 = int_to_ptr.hbm [resolvable:$true] %s209
          %s211 = sshll.u32 [#allocation5], 4
          %s212 = int_to_ptr.vmem [resolvable:$true] %s211
          %214 = dma.hbm_to_vmem [thread:$0]  %s210, 16, %s212, [#allocation6]
        $region32: #{tpu_custom_call.1} parent=11 // pred_fallthru
          _
      $region12: #{tpu_custom_call.1} parent=5 // pred_fallthru
        _
      %p215 = scmp.lt.s32.totalorder %s19, 2
      // Predicated region
      $region33: #{tpu_custom_call.1} parent=5 // pred_check
        %p216 = pneg %p215
      $region34: #{tpu_custom_call.1} parent=5 // pred_check_branch
        %218 = sbr.rel (%p216) target = $region36
      $region35: #{tpu_custom_call.1} parent=5 // pred_region
        // Predicated region
        $region37: #{tpu_custom_call.1} parent=35 // pred_check
          %p219 = pneg %p39
        $region38: #{tpu_custom_call.1} parent=35 // pred_check_branch
          %221 = sbr.rel (%p219) target = $region40
        $region39: #{tpu_custom_call.1} parent=35 // pred_region
          %s222 = sand.u32 %s29, 1
          %s223 = scalar_lea.sflag [#allocation3], %s222
          %s224 = sand.u32 %s29, 1
          %s225 = smul.addr %s224, 8
          %s226 = scalar_lea.vmem [#allocation2], %s225
          %228 = vsyncadd %s223, 0
          %s229 = smul.addr %s19, 8
          %s230 = scalar_lea.hbm %s0, %s229
          %s232 = sshll.u32 %s230, 4
          %s233 = int_to_ptr.hbm [resolvable:$true] %s232
          %s234 = sshll.u32 %s226, 4
          %s235 = int_to_ptr.vmem [resolvable:$true] %s234
          %237 = dma.hbm_to_vmem [thread:$0]  %s233, 128, %s235, %s223
        $region40: #{tpu_custom_call.1} parent=35 // pred_fallthru
          _
      $region36: #{tpu_custom_call.1} parent=5 // pred_fallthru
        _
      %p238 = scmp.le.s32.totalorder 1, %s19
      %p239 = scmp.lt.s32.totalorder %s19, 3
      %p240 = pnand %p238, %p239
      %p241 = pneg %p240
      // Predicated region
      $region41: #{tpu_custom_call.1} parent=5 // pred_check
        _
      $region42: #{tpu_custom_call.1} parent=5 // pred_check_branch
        %243 = sbr.rel (%p240) target = $region44
      $region43: #{tpu_custom_call.1} parent=5 // pred_region
        %s244 = ssub.s32 %s19, 1
        %s245 = sand.u32 %s32, 1
        %s246 = scalar_lea.sflag [#allocation3], %s245
        %s247 = sand.u32 %s32, 1
        %s248 = smul.addr %s247, 8
        %s249 = scalar_lea.vmem [#allocation2], %s248
        // Predicated region
        $region45: #{tpu_custom_call.1} parent=43 // pred_check
          %p250 = pneg %p45
        $region46: #{tpu_custom_call.1} parent=43 // pred_check_branch
          %252 = sbr.rel (%p250) target = $region48
        $region47: #{tpu_custom_call.1} parent=43 // pred_region
          %254 = dma.done %s246, 128
        $region48: #{tpu_custom_call.1} parent=43 // pred_fallthru
          _
        // Predicated region
        $region49: #{tpu_custom_call.1} parent=43 // pred_check
          %p255 = pneg %p150
        $region50: #{tpu_custom_call.1} parent=43 // pred_check_branch
          %257 = sbr.rel (%p255) target = $region52
        $region51: #{tpu_custom_call.1} parent=43 // pred_region
          %259 = dma.done [#allocation6], 16
        $region52: #{tpu_custom_call.1} parent=43 // pred_fallthru
          _
        %s260 = sand.u32 %s32, 1
        %s261 = scalar_lea.sflag [#allocation3], %s260
        %s262 = sand.u32 %s32, 1
        %s263 = smul.addr %s262, 8
        %s264 = scalar_lea.vmem [#allocation2], %s263
        %p265 = pneg %p45
        %p266 = pneg %p42
        %p267 = pneg %p66
        %p268 = pneg %p63
        %p269 = pneg %p87
        %p270 = pneg %p84
        %p271 = pneg %p108
        %p272 = pneg %p105
        %p273 = pneg %p129
        %p274 = pneg %p126
        %p275 = pneg %p150
        %p276 = pneg %p147
        %p277 = pneg %p176
        %p278 = pneg %p173
        %s279 = sand.u32 %s163, 1
        %s280 = scalar_lea.sflag [#allocation4], %s279
        %s281 = sand.u32 %s163, 1
        %s282 = smul.addr %s281, 8
        %s283 = scalar_lea.vmem [#allocation7], %s282
        %v284 = vld [vmem:[%s249] sm:$0xff]
        %v285 = vld [vmem:[%s1] sm:$0x1]
        %vm286 = vcmask 523264
        %v287 = vsel %vm286, %v284, 0.0
        %288 = vadd.xlane.f32.xlu0 %v287
        %v289 = vpop.xlane.xlu0 %288
        %v290 = vrcp.pop 64.0
        %v291 = vmul.f32 64.0, %v290
        %v292 = vsub.f32 1.0, %v291
        %v293 = vmul.f32 %v290, %v292
        %v294 = vadd.f32 %v290, %v293
        %vm295 = vweird.f32 %v290
        %v296 = vsel %vm295, %v290, %v294
        %v297 = vmul.f32 %v289, %v296
        %v298 = vsub.f32 %v284, %v297
        %v299 = vmul.f32 %v298, %v298
        %v300 = vsel %vm286, %v299, 0.0
        %301 = vadd.xlane.f32.xlu0 %v300
        %v302 = vpop.xlane.xlu0 %301
        %v303 = vmul.f32 %v302, %v296
        %v304 = vadd.f32 %v303, 1e-05
        %v305 = vrsqrt.pop %v304
        %v306 = vmul.f32 %v305, %v304
        %v307 = vmul.f32 %v306, %v305
        %v308 = vmul.f32 0.5, %v307
        %v309 = vsub.f32 1.5, %v308
        %v310 = vmul.f32 %v305, %v309
        %vm311 = vweird.f32 %v304
        %vm312 = vweird.f32 %v305
        %vm313 = vmor %vm311, %vm312
        %v314 = vsel %vm313, %v305, %v310
        %v315 = vmul.f32 %v298, %v314
        %v317 = vperm.slane %v285, 0
        %v319 = vmul.f32 %v315, %v317
        %v320 = vld [vmem:[%s2] sm:$0x1]
        %v321 = vsel %vm286, %v319, 0.0
        %322 = vadd.xlane.f32.xlu0 %v321
        %v323 = vpop.xlane.xlu0 %322
        %v324 = vmul.f32 %v323, %v296
        %v325 = vsub.f32 %v319, %v324
        %v326 = vmul.f32 %v325, %v325
        %v327 = vsel %vm286, %v326, 0.0
        %328 = vadd.xlane.f32.xlu0 %v327
        %v329 = vpop.xlane.xlu0 %328
        %v330 = vmul.f32 %v329, %v296
        %v331 = vadd.f32 %v330, 1e-05
        %v332 = vrsqrt.pop %v331
        %v333 = vmul.f32 %v332, %v331
        %v334 = vmul.f32 %v333, %v332
        %v335 = vmul.f32 0.5, %v334
        %v336 = vsub.f32 1.5, %v335
        %v337 = vmul.f32 %v332, %v336
        %vm338 = vweird.f32 %v331
        %vm339 = vweird.f32 %v332
        %vm340 = vmor %vm338, %vm339
        %v341 = vsel %vm340, %v332, %v337
        %v342 = vmul.f32 %v325, %v341
        %v344 = vperm.slane %v320, 0
        %v346 = vmul.f32 %v342, %v344
        %v347 = vld [vmem:[%s3] sm:$0xff]
        %v348 = vld [vmem:[%s3 + $0x8] sm:$0xff]
        %v349 = vld [vmem:[%s3 + $0x10] sm:$0xff]
        %v350 = vld [vmem:[%s3 + $0x18] sm:$0xff]
        %v351 = vld [vmem:[%s3 + $0x20] sm:$0xff]
        %v352 = vld [vmem:[%s3 + $0x28] sm:$0xff]
        %v353 = vld [vmem:[%s3 + $0x30] sm:$0xff]
        %v354 = vld [vmem:[%s3 + $0x38] sm:$0xff]
        %v355 = vld [vmem:[%s3 + $0x40] sm:$0xff]
        %v356 = vld [vmem:[%s3 + $0x48] sm:$0xff]
        %v357 = vld [vmem:[%s3 + $0x50] sm:$0xff]
        %v358 = vld [vmem:[%s3 + $0x58] sm:$0xff]
        %v359 = vld [vmem:[%s3 + $0x60] sm:$0xff]
        %v360 = vld [vmem:[%s3 + $0x68] sm:$0xff]
        %v361 = vld [vmem:[%s3 + $0x70] sm:$0xff]
        %v362 = vld [vmem:[%s3 + $0x78] sm:$0xff]
        %v363 = vld [vmem:[%s3 + $0x80] sm:$0xff]
        %v364 = vld [vmem:[%s3 + $0x88] sm:$0xff]
        %v365 = vld [vmem:[%s3 + $0x90] sm:$0xff]
        %v366 = vld [vmem:[%s3 + $0x98] sm:$0xff]
        %v367 = vld [vmem:[%s3 + $0xa0] sm:$0xff]
        %v368 = vld [vmem:[%s3 + $0xa8] sm:$0xff]
        %v369 = vld [vmem:[%s3 + $0xb0] sm:$0xff]
        %v370 = vld [vmem:[%s3 + $0xb8] sm:$0xff]
        %v372 = vsel %vm286, %v346, 0
        %374 = vmatpush.msra.mxu0 0.0
        %375 = vmatpush.msra.mxu0 0.0
        %376 = vmatpush.msra.mxu0 0.0
        %377 = vmatpush.msra.mxu0 0.0
        %378 = vmatpush.msra.mxu0 0.0
        %379 = vmatpush.msra.mxu0 0.0
        %380 = vmatpush.msra.mxu0 0.0
        %381 = vmatpush.msra.mxu0 0.0
        %382 = vmatpush.msra.mxu0 %v368
        %383 = vmatpush.msra.mxu0 %v365
        %384 = vmatpush.msra.mxu0 %v362
        %385 = vmatpush.msra.mxu0 %v359
        %386 = vmatpush.msra.mxu0 %v356
        %387 = vmatpush.msra.mxu0 %v353
        %388 = vmatpush.msra.mxu0 %v350
        %389 = vmatpush.msra.mxu0 %v347
        %390 = vmatmul.f32.gmra.mxu0 %v372
        %v391 = vpop.f32.mrf.mxu0
        %v392 = vadd.f32 0.0, %v391
        %393 = vdwg.mxu0
        %394 = vmatpush.msra.mxu0 0.0
        %395 = vmatpush.msra.mxu0 0.0
        %396 = vmatpush.msra.mxu0 0.0
        %397 = vmatpush.msra.mxu0 0.0
        %398 = vmatpush.msra.mxu0 0.0
        %399 = vmatpush.msra.mxu0 0.0
        %400 = vmatpush.msra.mxu0 0.0
        %401 = vmatpush.msra.mxu0 0.0
        %402 = vmatpush.msra.mxu0 %v369
        %403 = vmatpush.msra.mxu0 %v366
        %404 = vmatpush.msra.mxu0 %v363
        %405 = vmatpush.msra.mxu0 %v360
        %406 = vmatpush.msra.mxu0 %v357
        %407 = vmatpush.msra.mxu0 %v354
        %408 = vmatpush.msra.mxu0 %v351
        %409 = vmatpush.msra.mxu0 %v348
        %410 = vmatmul.f32.gmra.mxu0 %v372
        %v411 = vpop.f32.mrf.mxu0
        %v412 = vadd.f32 0.0, %v411
        %413 = vdwg.mxu0
        %414 = vmatpush.msra.mxu0 0.0
        %415 = vmatpush.msra.mxu0 0.0
        %416 = vmatpush.msra.mxu0 0.0
        %417 = vmatpush.msra.mxu0 0.0
        %418 = vmatpush.msra.mxu0 0.0
        %419 = vmatpush.msra.mxu0 0.0
        %420 = vmatpush.msra.mxu0 0.0
        %421 = vmatpush.msra.mxu0 0.0
        %422 = vmatpush.msra.mxu0 %v370
        %423 = vmatpush.msra.mxu0 %v367
        %424 = vmatpush.msra.mxu0 %v364
        %425 = vmatpush.msra.mxu0 %v361
        %426 = vmatpush.msra.mxu0 %v358
        %427 = vmatpush.msra.mxu0 %v355
        %428 = vmatpush.msra.mxu0 %v352
        %429 = vmatpush.msra.mxu0 %v349
        %430 = vmatmul.f32.gmra.mxu0 %v372
        %v431 = vpop.f32.mrf.mxu0
        %v432 = vadd.f32 0.0, %v431
        %433 = vdwg.mxu0
        %vm434 = vcmask 261120
        %v436 = vsel %vm434, %v392, 0
        %v439 = vsel %vm434, %v412, 0
        %441 = vmatpush.xpose.msra.mxu0 0.0
        %442 = vmatpush.xpose.msra.mxu0 0.0
        %443 = vmatpush.xpose.msra.mxu0 0.0
        %444 = vmatpush.xpose.msra.mxu0 0.0
        %445 = vmatpush.xpose.msra.mxu0 0.0
        %446 = vmatpush.xpose.msra.mxu0 0.0
        %447 = vmatpush.xpose.msra.mxu0 0.0
        %448 = vmatpush.xpose.msra.mxu0 0.0
        %449 = vmatpush.xpose.msra.mxu0 0.0
        %450 = vmatpush.xpose.msra.mxu0 0.0
        %451 = vmatpush.xpose.msra.mxu0 0.0
        %452 = vmatpush.xpose.msra.mxu0 0.0
        %453 = vmatpush.xpose.msra.mxu0 0.0
        %454 = vmatpush.xpose.msra.mxu0 0.0
        %455 = vmatpush.xpose.msra.mxu0 0.0
        %456 = vmatpush.xpose.msra.mxu0 %v439
        %457 = vmatmul.f32.gmra.mxu0 %v436
        %v458 = vpop.f32.mrf.mxu0
        %v459 = vadd.f32 0.0, %v458
        %460 = vdwg.mxu0
        %vm461 = vcmask 64512
        %v462 = vsel %vm461, %v459, -inf
        %463 = vmax.xlane.f32.xlu0 %v462
        %v464 = vpop.xlane.xlu0 %463
        %v465 = vsub.f32 %v459, %v464
        %v466 = vmul.f32 %v465, 1.442695
        %v467 = vpow.pop %v466
        %v468 = vsel %vm461, %v467, 0.0
        %469 = vadd.xlane.f32.xlu0 %v468
        %v470 = vpop.xlane.xlu0 %469
        %v471 = vrcp.pop %v470
        %v472 = vmul.f32 %v470, %v471
        %v473 = vsub.f32 1.0, %v472
        %v474 = vmul.f32 %v471, %v473
        %v475 = vadd.f32 %v471, %v474
        %vm476 = vweird.f32 %v470
        %vm477 = vweird.f32 %v471
        %vm478 = vmor %vm476, %vm477
        %v479 = vsel %vm478, %v471, %v475
        %v480 = vand.u32 2147483647, %v470
        %vm481 = vcmp.eq.f32.partialorder %v480, 8.507059e+37
        %v482 = vand.u32 %v470, 2147483648
        %v483 = vor.u32 1.1754944e-38, %v482
        %v484 = vsel %vm481, %v483, %v479
        %v485 = vmul.f32 %v467, %v484
        %v487 = vsel %vm461, %v485, 0
        %489 = vmatpush.msra.mxu0 0.0
        %490 = vmatpush.msra.mxu0 0.0
        %491 = vmatpush.msra.mxu0 0.0
        %492 = vmatpush.msra.mxu0 0.0
        %493 = vmatpush.msra.mxu0 0.0
        %494 = vmatpush.msra.mxu0 0.0
        %495 = vmatpush.msra.mxu0 0.0
        %496 = vmatpush.msra.mxu0 0.0
        %497 = vmatpush.msra.mxu0 0.0
        %498 = vmatpush.msra.mxu0 0.0
        %499 = vmatpush.msra.mxu0 0.0
        %500 = vmatpush.msra.mxu0 0.0
        %501 = vmatpush.msra.mxu0 0.0
        %502 = vmatpush.msra.mxu0 0.0
        %503 = vmatpush.msra.mxu0 0.0
        %504 = vmatpush.msra.mxu0 %v432
        %505 = vmatmul.f32.gmra.mxu0 %v487
        %v506 = vpop.f32.mrf.mxu0
        %v507 = vadd.f32 0.0, %v506
        %508 = vdwg.mxu0
        %509 = vrot.lane.b32.xlu0 %v392, 96
        %v510 = vpop.permute.xlu0 %509
        %511 = vrot.lane.b32.xlu0 %v412, 96
        %v512 = vpop.permute.xlu0 %511
        %v513 = vsel %vm434, %v510, 0
        %v515 = vsel %vm434, %v512, 0
        %517 = vmatpush.xpose.msra.mxu0 0.0
        %518 = vmatpush.xpose.msra.mxu0 0.0
        %519 = vmatpush.xpose.msra.mxu0 0.0
        %520 = vmatpush.xpose.msra.mxu0 0.0
        %521 = vmatpush.xpose.msra.mxu0 0.0
        %522 = vmatpush.xpose.msra.mxu0 0.0
        %523 = vmatpush.xpose.msra.mxu0 0.0
        %524 = vmatpush.xpose.msra.mxu0 0.0
        %525 = vmatpush.xpose.msra.mxu0 0.0
        %526 = vmatpush.xpose.msra.mxu0 0.0
        %527 = vmatpush.xpose.msra.mxu0 0.0
        %528 = vmatpush.xpose.msra.mxu0 0.0
        %529 = vmatpush.xpose.msra.mxu0 0.0
        %530 = vmatpush.xpose.msra.mxu0 0.0
        %531 = vmatpush.xpose.msra.mxu0 0.0
        %532 = vmatpush.xpose.msra.mxu0 %v515
        %533 = vmatmul.f32.gmra.mxu0 %v513
        %v534 = vpop.f32.mrf.mxu0
        %v535 = vadd.f32 0.0, %v534
        %536 = vdwg.mxu0
        %v537 = vsel %vm461, %v535, -inf
        %538 = vmax.xlane.f32.xlu0 %v537
        %v539 = vpop.xlane.xlu0 %538
        %v540 = vsub.f32 %v535, %v539
        %v541 = vmul.f32 %v540, 1.442695
        %v542 = vpow.pop %v541
        %v543 = vsel %vm461, %v542, 0.0
        %544 = vadd.xlane.f32.xlu0 %v543
        %v545 = vpop.xlane.xlu0 %544
        %v546 = vrcp.pop %v545
        %v547 = vmul.f32 %v545, %v546
        %v548 = vsub.f32 1.0, %v547
        %v549 = vmul.f32 %v546, %v548
        %v550 = vadd.f32 %v546, %v549
        %vm551 = vweird.f32 %v545
        %vm552 = vweird.f32 %v546
        %vm553 = vmor %vm551, %vm552
        %v554 = vsel %vm553, %v546, %v550
        %v555 = vand.u32 2147483647, %v545
        %vm556 = vcmp.eq.f32.partialorder %v555, 8.507059e+37
        %v557 = vand.u32 %v545, 2147483648
        %v558 = vor.u32 1.1754944e-38, %v557
        %v559 = vsel %vm556, %v558, %v554
        %v560 = vmul.f32 %v542, %v559
        %562 = vrot.lane.b32.xlu0 %v432, 96
        %v563 = vpop.permute.xlu0 %562
        %v566 = vsel %vm461, %v560, 0
        %568 = vmatpush.msra.mxu0 0.0
        %569 = vmatpush.msra.mxu0 0.0
        %570 = vmatpush.msra.mxu0 0.0
        %571 = vmatpush.msra.mxu0 0.0
        %572 = vmatpush.msra.mxu0 0.0
        %573 = vmatpush.msra.mxu0 0.0
        %574 = vmatpush.msra.mxu0 0.0
        %575 = vmatpush.msra.mxu0 0.0
        %576 = vmatpush.msra.mxu0 0.0
        %577 = vmatpush.msra.mxu0 0.0
        %578 = vmatpush.msra.mxu0 0.0
        %579 = vmatpush.msra.mxu0 0.0
        %580 = vmatpush.msra.mxu0 0.0
        %581 = vmatpush.msra.mxu0 0.0
        %582 = vmatpush.msra.mxu0 0.0
        %583 = vmatpush.msra.mxu0 %v563
        %584 = vmatmul.f32.gmra.mxu0 %v566
        %v585 = vpop.f32.mrf.mxu0
        %v586 = vadd.f32 0.0, %v585
        %587 = vdwg.mxu0
        %588 = vrot.lane.b32.xlu0 %v392, 64
        %v589 = vpop.permute.xlu0 %588
        %590 = vrot.lane.b32.xlu0 %v412, 64
        %v591 = vpop.permute.xlu0 %590
        %v592 = vsel %vm434, %v589, 0
        %v594 = vsel %vm434, %v591, 0
        %596 = vmatpush.xpose.msra.mxu0 0.0
        %597 = vmatpush.xpose.msra.mxu0 0.0
        %598 = vmatpush.xpose.msra.mxu0 0.0
        %599 = vmatpush.xpose.msra.mxu0 0.0
        %600 = vmatpush.xpose.msra.mxu0 0.0
        %601 = vmatpush.xpose.msra.mxu0 0.0
        %602 = vmatpush.xpose.msra.mxu0 0.0
        %603 = vmatpush.xpose.msra.mxu0 0.0
        %604 = vmatpush.xpose.msra.mxu0 0.0
        %605 = vmatpush.xpose.msra.mxu0 0.0
        %606 = vmatpush.xpose.msra.mxu0 0.0
        %607 = vmatpush.xpose.msra.mxu0 0.0
        %608 = vmatpush.xpose.msra.mxu0 0.0
        %609 = vmatpush.xpose.msra.mxu0 0.0
        %610 = vmatpush.xpose.msra.mxu0 0.0
        %611 = vmatpush.xpose.msra.mxu0 %v594
        %612 = vmatmul.f32.gmra.mxu0 %v592
        %v613 = vpop.f32.mrf.mxu0
        %v614 = vadd.f32 0.0, %v613
        %615 = vdwg.mxu0
        %v616 = vsel %vm461, %v614, -inf
        %617 = vmax.xlane.f32.xlu0 %v616
        %v618 = vpop.xlane.xlu0 %617
        %v619 = vsub.f32 %v614, %v618
        %v620 = vmul.f32 %v619, 1.442695
        %v621 = vpow.pop %v620
        %v622 = vsel %vm461, %v621, 0.0
        %623 = vadd.xlane.f32.xlu0 %v622
        %v624 = vpop.xlane.xlu0 %623
        %v625 = vrcp.pop %v624
        %v626 = vmul.f32 %v624, %v625
        %v627 = vsub.f32 1.0, %v626
        %v628 = vmul.f32 %v625, %v627
        %v629 = vadd.f32 %v625, %v628
        %vm630 = vweird.f32 %v624
        %vm631 = vweird.f32 %v625
        %vm632 = vmor %vm630, %vm631
        %v633 = vsel %vm632, %v625, %v629
        %v634 = vand.u32 2147483647, %v624
        %vm635 = vcmp.eq.f32.partialorder %v634, 8.507059e+37
        %v636 = vand.u32 %v624, 2147483648
        %v637 = vor.u32 1.1754944e-38, %v636
        %v638 = vsel %vm635, %v637, %v633
        %v639 = vmul.f32 %v621, %v638
        %640 = vrot.lane.b32.xlu0 %v432, 64
        %v641 = vpop.permute.xlu0 %640
        %v644 = vsel %vm461, %v639, 0
        %646 = vmatpush.msra.mxu0 0.0
        %647 = vmatpush.msra.mxu0 0.0
        %648 = vmatpush.msra.mxu0 0.0
        %649 = vmatpush.msra.mxu0 0.0
        %650 = vmatpush.msra.mxu0 0.0
        %651 = vmatpush.msra.mxu0 0.0
        %652 = vmatpush.msra.mxu0 0.0
        %653 = vmatpush.msra.mxu0 0.0
        %654 = vmatpush.msra.mxu0 0.0
        %655 = vmatpush.msra.mxu0 0.0
        %656 = vmatpush.msra.mxu0 0.0
        %657 = vmatpush.msra.mxu0 0.0
        %658 = vmatpush.msra.mxu0 0.0
        %659 = vmatpush.msra.mxu0 0.0
        %660 = vmatpush.msra.mxu0 0.0
        %661 = vmatpush.msra.mxu0 %v641
        %662 = vmatmul.f32.gmra.mxu0 %v644
        %v663 = vpop.f32.mrf.mxu0
        %v664 = vadd.f32 0.0, %v663
        %665 = vdwg.mxu0
        %666 = vrot.lane.b32.xlu0 %v392, 32
        %v667 = vpop.permute.xlu0 %666
        %668 = vrot.lane.b32.xlu0 %v412, 32
        %v669 = vpop.permute.xlu0 %668
        %v670 = vsel %vm434, %v667, 0
        %v672 = vsel %vm434, %v669, 0
        %674 = vmatpush.xpose.msra.mxu0 0.0
        %675 = vmatpush.xpose.msra.mxu0 0.0
        %676 = vmatpush.xpose.msra.mxu0 0.0
        %677 = vmatpush.xpose.msra.mxu0 0.0
        %678 = vmatpush.xpose.msra.mxu0 0.0
        %679 = vmatpush.xpose.msra.mxu0 0.0
        %680 = vmatpush.xpose.msra.mxu0 0.0
        %681 = vmatpush.xpose.msra.mxu0 0.0
        %682 = vmatpush.xpose.msra.mxu0 0.0
        %683 = vmatpush.xpose.msra.mxu0 0.0
        %684 = vmatpush.xpose.msra.mxu0 0.0
        %685 = vmatpush.xpose.msra.mxu0 0.0
        %686 = vmatpush.xpose.msra.mxu0 0.0
        %687 = vmatpush.xpose.msra.mxu0 0.0
        %688 = vmatpush.xpose.msra.mxu0 0.0
        %689 = vmatpush.xpose.msra.mxu0 %v672
        %690 = vmatmul.f32.gmra.mxu0 %v670
        %v691 = vpop.f32.mrf.mxu0
        %v692 = vadd.f32 0.0, %v691
        %693 = vdwg.mxu0
        %v694 = vsel %vm461, %v692, -inf
        %695 = vmax.xlane.f32.xlu0 %v694
        %v696 = vpop.xlane.xlu0 %695
        %v697 = vsub.f32 %v692, %v696
        %v698 = vmul.f32 %v697, 1.442695
        %v699 = vpow.pop %v698
        %v700 = vsel %vm461, %v699, 0.0
        %701 = vadd.xlane.f32.xlu0 %v700
        %v702 = vpop.xlane.xlu0 %701
        %v703 = vrcp.pop %v702
        %v704 = vmul.f32 %v702, %v703
        %v705 = vsub.f32 1.0, %v704
        %v706 = vmul.f32 %v703, %v705
        %v707 = vadd.f32 %v703, %v706
        %vm708 = vweird.f32 %v702
        %vm709 = vweird.f32 %v703
        %vm710 = vmor %vm708, %vm709
        %v711 = vsel %vm710, %v703, %v707
        %v712 = vand.u32 2147483647, %v702
        %vm713 = vcmp.eq.f32.partialorder %v712, 8.507059e+37
        %v714 = vand.u32 %v702, 2147483648
        %v715 = vor.u32 1.1754944e-38, %v714
        %v716 = vsel %vm713, %v715, %v711
        %v717 = vmul.f32 %v699, %v716
        %718 = vrot.lane.b32.xlu0 %v432, 32
        %v719 = vpop.permute.xlu0 %718
        %v722 = vsel %vm461, %v717, 0
        %724 = vmatpush.msra.mxu0 0.0
        %725 = vmatpush.msra.mxu0 0.0
        %726 = vmatpush.msra.mxu0 0.0
        %727 = vmatpush.msra.mxu0 0.0
        %728 = vmatpush.msra.mxu0 0.0
        %729 = vmatpush.msra.mxu0 0.0
        %730 = vmatpush.msra.mxu0 0.0
        %731 = vmatpush.msra.mxu0 0.0
        %732 = vmatpush.msra.mxu0 0.0
        %733 = vmatpush.msra.mxu0 0.0
        %734 = vmatpush.msra.mxu0 0.0
        %735 = vmatpush.msra.mxu0 0.0
        %736 = vmatpush.msra.mxu0 0.0
        %737 = vmatpush.msra.mxu0 0.0
        %738 = vmatpush.msra.mxu0 0.0
        %739 = vmatpush.msra.mxu0 %v719
        %740 = vmatmul.f32.gmra.mxu0 %v722
        %v741 = vpop.f32.mrf.mxu0
        %v742 = vadd.f32 0.0, %v741
        %743 = vdwg.mxu0
        %745 = vrot.lane.b32.xlu0 %v586, 32
        %v746 = vpop.permute.xlu0 %745
        %749 = vrot.lane.b32.xlu0 %v664, 64
        %v750 = vpop.permute.xlu0 %749
        %753 = vrot.lane.b32.xlu0 %v742, 96
        %v754 = vpop.permute.xlu0 %753
        %v756 = vsel %vm434, %v507, %v746
        %v757 = vsel %vm286, %v756, %v750
        %vm758 = vcmask 785408
        %v759 = vsel %vm758, %v757, %v754
        %v760 = vld [vmem:[%s4] sm:$0xff]
        %v761 = vld [vmem:[%s4 + $0x8] sm:$0xff]
        %v762 = vld [vmem:[%s4 + $0x10] sm:$0xff]
        %v763 = vld [vmem:[%s4 + $0x18] sm:$0xff]
        %v764 = vld [vmem:[%s4 + $0x20] sm:$0xff]
        %v765 = vld [vmem:[%s4 + $0x28] sm:$0xff]
        %v766 = vld [vmem:[%s4 + $0x30] sm:$0xff]
        %v767 = vld [vmem:[%s4 + $0x38] sm:$0xff]
        %v768 = vld [vmem:[%s4 + $0x40] sm:$0xff]
        %v769 = vld [vmem:[%s4 + $0x48] sm:$0xff]
        %v770 = vld [vmem:[%s4 + $0x50] sm:$0xff]
        %v771 = vld [vmem:[%s4 + $0x58] sm:$0xff]
        %v772 = vld [vmem:[%s4 + $0x60] sm:$0xff]
        %v773 = vld [vmem:[%s4 + $0x68] sm:$0xff]
        %v774 = vld [vmem:[%s4 + $0x70] sm:$0xff]
        %v775 = vld [vmem:[%s4 + $0x78] sm:$0xff]
        %776 = vmatpush.msra.mxu0 %v775
        %777 = vmatpush.msra.mxu0 %v774
        %778 = vmatpush.msra.mxu0 %v773
        %779 = vmatpush.msra.mxu0 %v772
        %780 = vmatpush.msra.mxu0 %v771
        %781 = vmatpush.msra.mxu0 %v770
        %782 = vmatpush.msra.mxu0 %v769
        %783 = vmatpush.msra.mxu0 %v768
        %784 = vmatpush.msra.mxu0 %v767
        %785 = vmatpush.msra.mxu0 %v766
        %786 = vmatpush.msra.mxu0 %v765
        %787 = vmatpush.msra.mxu0 %v764
        %788 = vmatpush.msra.mxu0 %v763
        %789 = vmatpush.msra.mxu0 %v762
        %790 = vmatpush.msra.mxu0 %v761
        %791 = vmatpush.msra.mxu0 %v760
        %792 = vmatmul.f32.gmra.mxu0 %v759
        %v793 = vpop.f32.mrf.mxu0
        %v794 = vadd.f32 0.0, %v793
        %795 = vdwg.mxu0
        %v796 = vld [vmem:[#allocation5] sm:$0x1]
        %v797 = vsel %vm286, %v794, 0.0
        %798 = vadd.xlane.f32.xlu0 %v797
        %v799 = vpop.xlane.xlu0 %798
        %v800 = vmul.f32 %v799, %v296
        %v801 = vsub.f32 %v794, %v800
        %v802 = vmul.f32 %v801, %v801
        %v803 = vsel %vm286, %v802, 0.0
        %804 = vadd.xlane.f32.xlu0 %v803
        %v805 = vpop.xlane.xlu0 %804
        %v806 = vmul.f32 %v805, %v296
        %v807 = vadd.f32 %v806, 1e-05
        %v808 = vrsqrt.pop %v807
        %v809 = vmul.f32 %v808, %v807
        %v810 = vmul.f32 %v809, %v808
        %v811 = vmul.f32 0.5, %v810
        %v812 = vsub.f32 1.5, %v811
        %v813 = vmul.f32 %v808, %v812
        %vm814 = vweird.f32 %v807
        %vm815 = vweird.f32 %v808
        %vm816 = vmor %vm814, %vm815
        %v817 = vsel %vm816, %v808, %v813
        %v818 = vmul.f32 %v801, %v817
        %v820 = vperm.slane %v796, 0
        %v822 = vmul.f32 %v818, %v820
        %v823 = vadd.f32 %v822, %v319
        %824 = vst.msk [vmem:[%s283] sm:$0xff] %vm286, %v823
        %s825 = sand.u32 %s163, 1
        %s826 = scalar_lea.sflag [#allocation4], %s825
        %s827 = sand.u32 %s163, 1
        %s828 = smul.addr %s827, 8
        %s829 = scalar_lea.vmem [#allocation7], %s828
        // Predicated region
        $region53: #{tpu_custom_call.1} parent=43 // pred_check
          %p830 = pneg %p173
        $region54: #{tpu_custom_call.1} parent=43 // pred_check_branch
          %832 = sbr.rel (%p830) target = $region56
        $region55: #{tpu_custom_call.1} parent=43 // pred_region
          %834 = vsyncadd %s826, 0
          %s835 = smul.addr %s24, 8
          %s836 = scalar_lea.hbm %s6, %s835
          %s838 = sshll.u32 %s829, 4
          %s839 = int_to_ptr.vmem [resolvable:$true] %s838
          %s840 = sshll.u32 %s836, 4
          %s841 = int_to_ptr.hbm [resolvable:$true] %s840
          %843 = dma.vmem_to_hbm [thread:$0]  %s839, 128, %s841, %s826
        $region56: #{tpu_custom_call.1} parent=43 // pred_fallthru
          _
      $region44: #{tpu_custom_call.1} parent=5 // pred_fallthru
        _
      %p844 = scmp.le.s32.totalorder 2, %s19
      // Predicated region
      $region57: #{tpu_custom_call.1} parent=5 // pred_check
        %p845 = pneg %p844
      $region58: #{tpu_custom_call.1} parent=5 // pred_check_branch
        %847 = sbr.rel (%p845) target = $region60
      $region59: #{tpu_custom_call.1} parent=5 // pred_region
        %s848 = ssub.s32 %s19, 2
        // Predicated region
        $region61: #{tpu_custom_call.1} parent=59 // pred_check
          %p849 = pneg %p179
        $region62: #{tpu_custom_call.1} parent=59 // pred_check_branch
          %851 = sbr.rel (%p849) target = $region64
        $region63: #{tpu_custom_call.1} parent=59 // pred_region
          %s852 = sand.u32 %s164, 1
          %s853 = scalar_lea.sflag [#allocation4], %s852
          %s854 = sand.u32 %s164, 1
          %s855 = smul.addr %s854, 8
          %s856 = scalar_lea.vmem [#allocation7], %s855
          %858 = dma.done %s853, 128
        $region64: #{tpu_custom_call.1} parent=59 // pred_fallthru
          _
      $region60: #{tpu_custom_call.1} parent=5 // pred_fallthru
        _
    $region6: #{tpu_custom_call.1} parent=1 // loop_footer
      %s23 = sadd.s32 1, %s19
    $region7: #{tpu_custom_call.1} parent=1 // loop_footer_branch
      %18 = sbr.rel target = $region3
    $region8: #{tpu_custom_call.1} parent=1 // loop_exit
      _
    %859 = vsyncpa [#allocation3], 1
    %s860 = scalar_lea.sflag [#allocation3], 1
    %861 = vsyncpa %s860, 1
    %862 = vsyncpa [#allocation6], 1
    %863 = vsyncpa [#allocation4], 1
    %s864 = scalar_lea.sflag [#allocation4], 1
    %865 = vsyncpa %s864, 1

</llo_original>
